<compile_context>
chip_gen: v7x
topology: tpu7x:2x2x1
jax: 0.10.0
libtpu: 0.0.40
codegen_flags: <defaults>
</compile_context>

<pallas_src>
import jax
import jax.numpy as jnp
from jax.experimental import pallas as pl
from jax.experimental.pallas import tpu as pltpu


def _round_up(n, m):
    return ((n + m - 1) // m) * m


def critic_kernel(x_ref, w1_ref, b1_ref, w2_ref, b2_ref, out_ref):
    O = out_ref.shape[-1]
    # Cast activations to bf16 on the VPU (cast slots are not the bottleneck).
    x = x_ref[...].astype(w1_ref.dtype)                       # (TM, D_in) bf16
    # hidden = relu(x @ W1 + b1): bf16 operands on the MXU, fp32 accumulate.
    h = jnp.dot(x, w1_ref[...], preferred_element_type=jnp.float32)
    h = jnp.maximum(h + b1_ref[...], 0.0)                     # fp32, (TM, Hp)
    # q = hidden @ W2: lane-padded (TM, Op) MXU result kept in registers only.
    q = jnp.dot(h.astype(w2_ref.dtype), w2_ref[...],
                preferred_element_type=jnp.float32)           # (TM, Op) fp32
    # Store only the real O output columns (lane-narrow masked store is
    # negligible vs. the HBM DMA savings of not writing 128 padded lanes).
    out_ref[...] = q[:, :O] + b2_ref[...]                     # (TM, O) fp32


def prepare_critic_params(w1, b1, w2, b2):
    """Pad / cast parameters ONCE, outside the per-step hot path.

    w1: (D_in, H), b1: (1, H), w2: (H, O), b2: (1, O).
    Hidden dim padded to a multiple of 128 so both MXU contractions are
    lane-dense; W2's output dim padded to 128 only for the in-VMEM MXU pass
    (the stored output keeps the true O).
    """
    D_in, H = w1.shape
    O = w2.shape[1]
    Hp = _round_up(H, 128)
    Op = _round_up(O, 128)
    w1p = jnp.zeros((D_in, Hp), jnp.bfloat16).at[:, :H].set(
        w1.astype(jnp.bfloat16))
    b1p = jnp.zeros((1, Hp), jnp.float32).at[:, :H].set(b1.astype(jnp.float32))
    w2p = jnp.zeros((Hp, Op), jnp.bfloat16).at[:H, :O].set(
        w2.astype(jnp.bfloat16))
    b2p = b2.astype(jnp.float32).reshape(1, O)
    return w1p, b1p, w2p, b2p


def critic_forward(x, w1p, b1p, w2p, b2p, *, block_m=1024):
    """x: (B, D_in) fp32; params from prepare_critic_params. Returns (B, O)."""
    B, D_in = x.shape
    Hp = w1p.shape[1]
    Op = w2p.shape[1]
    O = b2p.shape[1]

    # Big batch tiles (per-step overhead ~0.35 us), but cap at ceil(B/2) rows
    # so the grid has >=2 steps and both v7x TensorCores get batch shards.
    TM = min(block_m, max(8, _round_up(pl.cdiv(B, 2), 8)))
    grid = (pl.cdiv(B, TM),)

    cost = pl.CostEstimate(
        flops=2 * B * (D_in * Hp + Hp * Op),
        transcendentals=0,
        bytes_accessed=(B * D_in * x.dtype.itemsize      # x read
                        + B * O * 4                      # out write
                        + w1p.size * 2 + b1p.size * 4    # resident params
                        + w2p.size * 2 + b2p.size * 4),
    )

    resident = lambda shape: pl.BlockSpec(shape, lambda i: (0,) * len(shape))

    return pl.pallas_call(
        critic_kernel,
        out_shape=jax.ShapeDtypeStruct((B, O), jnp.float32),
        grid=grid,
        in_specs=[
            pl.BlockSpec((TM, D_in), lambda i: (i, 0)),   # x: batch-tiled
            resident((D_in, Hp)),                         # W1 resident in VMEM
            resident((1, Hp)),                            # b1 resident
            resident((Hp, Op)),                           # W2 resident
            resident((1, O)),                             # b2 resident
        ],
        out_specs=pl.BlockSpec((TM, O), lambda i: (i, 0)),
        compiler_params=pltpu.CompilerParams(
            dimension_semantics=("parallel",),
            vmem_limit_bytes=32 * 1024 * 1024,
        ),
        cost_estimate=cost,
    )(x, w1p, b1p, w2p, b2p)
    # TODO(synk): if input_dim ever grows past a few K, add a trailing
    # "arbitrary" K-reduction grid axis with a (TM, Hp) fp32 VMEM accumulator
    # (pl.when init/finalize) instead of keeping all of W1 resident, and use
    # pipeline_mode=pl.Buffered(1) on the constant-index weight specs to halve
    # their VMEM footprint on v7x (64 MiB physical VMEM).


def init_critic_params(key, input_dim, hidden_dim, output_dim):
    """Deterministic init mirroring PyTorch nn.Linear defaults + the
    value_head scaling (weight *= 0.1, bias *= 0.0) from Critic.__init__."""
    k1, k2, k3, k4 = jax.random.split(key, 4)
    bound1 = 1.0 / jnp.sqrt(jnp.float32(input_dim))
    bound2 = 1.0 / jnp.sqrt(jnp.float32(hidden_dim))
    # affine1
    w1 = jax.random.uniform(k1, (input_dim, hidden_dim), jnp.float32,
                            -bound1, bound1)
    b1 = jax.random.uniform(k2, (1, hidden_dim), jnp.float32, -bound1, bound1)
    # value_head (weight scaled by 0.1, bias zeroed, as in the module)
    w2 = jax.random.uniform(k3, (hidden_dim, output_dim), jnp.float32,
                            -bound2, bound2) * 0.1
    b2 = jax.random.uniform(k4, (1, output_dim), jnp.float32,
                            -bound2, bound2) * 0.0
    return w1, b1, w2, b2


if __name__ == "__main__":
    key = jax.random.PRNGKey(0)
    kx, kp = jax.random.split(key)

    batch, input_dim, hidden_dim, output_dim = 8, 16, 32, 1

    x = jax.random.normal(kx, (batch, input_dim), jnp.float32)
    w1, b1, w2, b2 = init_critic_params(kp, input_dim, hidden_dim, output_dim)

    # Parameters padded / cast once, outside the hot path.
    w1p, b1p, w2p, b2p = prepare_critic_params(w1, b1, w2, b2)

    q = critic_forward(x, w1p, b1p, w2p, b2p)
    jax.block_until_ready(q)

    # Reference in plain JAX (fp32); kernel uses bf16 MXU operands, so compare
    # with a bf16-appropriate tolerance.
    ref = jnp.maximum(x @ w1 + b1, 0.0) @ w2 + b2
    assert q.shape == (batch, output_dim)
    assert jnp.allclose(q, ref, atol=2e-2, rtol=2e-2), (
        f"max abs err = {jnp.max(jnp.abs(q - ref))}")

    print("KERNEL_OK")
</pallas_src>

<mosaic_0001>
module attributes {stable_mosaic.version = 11 : i64} {
  func.func @critic_kernel(%arg0: i32, %arg1: memref<8x16xf32, #tpu.memory_space<vmem>>, %arg2: memref<16x128xbf16, #tpu.memory_space<vmem>>, %arg3: memref<1x128xf32, #tpu.memory_space<vmem>>, %arg4: memref<128x128xbf16, #tpu.memory_space<vmem>>, %arg5: memref<1x1xf32, #tpu.memory_space<vmem>>, %arg6: memref<8x1xf32, #tpu.memory_space<vmem>>) attributes {dimension_semantics = [#tpu.dimension_semantics<parallel>], iteration_bounds = array<i64: 1>, scalar_prefetch = 0 : i64, scratch_operands = 0 : i64, tpu.core_type = #tpu.core_type<tc>, window_params = [{transform_indices = @transform_0, window_bounds = array<i64: 8, 16>}, {pipeline_mode = #tpu.pipeline_mode<synchronous>, transform_indices = @transform_1, window_bounds = array<i64: 16, 128>}, {pipeline_mode = #tpu.pipeline_mode<synchronous>, transform_indices = @transform_2, window_bounds = array<i64: 1, 128>}, {pipeline_mode = #tpu.pipeline_mode<synchronous>, transform_indices = @transform_3, window_bounds = array<i64: 128, 128>}, {pipeline_mode = #tpu.pipeline_mode<synchronous>, transform_indices = @transform_4, window_bounds = array<i64: 1, 1>}, {transform_indices = @transform_5, window_bounds = array<i64: 8, 1>}]} {
    %c0 = arith.constant 0 : index
    %c0_0 = arith.constant 0 : index
    %0 = vector.load %arg1[%c0, %c0_0] : memref<8x16xf32, #tpu.memory_space<vmem>>, vector<8x16xf32>
    %1 = arith.truncf %0 : vector<8x16xf32> to vector<8x16xbf16>
    %c0_1 = arith.constant 0 : index
    %c0_2 = arith.constant 0 : index
    %2 = vector.load %arg2[%c0_1, %c0_2] : memref<16x128xbf16, #tpu.memory_space<vmem>>, vector<16x128xbf16>
    %cst = arith.constant dense<0.000000e+00> : vector<8x128xf32>
    %3 = tpu.matmul %1, %2, %cst {dimension_numbers = #tpu.dot_dimension_numbers<[1], [0], [0], [1], [0, 0, 1, 1], [], []>} : vector<8x16xbf16>, vector<16x128xbf16>, vector<8x128xf32> -> vector<8x128xf32>
    %c0_3 = arith.constant 0 : index
    %c0_4 = arith.constant 0 : index
    %4 = vector.load %arg3[%c0_3, %c0_4] : memref<1x128xf32, #tpu.memory_space<vmem>>, vector<1x128xf32>
    %5 = vector.broadcast %4 : vector<1x128xf32> to vector<8x128xf32>
    %6 = arith.addf %3, %5 : vector<8x128xf32>
    %cst_5 = arith.constant 0.000000e+00 : f32
    %7 = vector.broadcast %cst_5 : f32 to vector<8x128xf32>
    %8 = arith.maximumf %6, %7 : vector<8x128xf32>
    %9 = arith.truncf %8 : vector<8x128xf32> to vector<8x128xbf16>
    %c0_6 = arith.constant 0 : index
    %c0_7 = arith.constant 0 : index
    %10 = vector.load %arg4[%c0_6, %c0_7] : memref<128x128xbf16, #tpu.memory_space<vmem>>, vector<128x128xbf16>
    %cst_8 = arith.constant dense<0.000000e+00> : vector<8x128xf32>
    %11 = tpu.matmul %9, %10, %cst_8 {dimension_numbers = #tpu.dot_dimension_numbers<[1], [0], [0], [1], [0, 0, 1, 1], [], []>} : vector<8x128xbf16>, vector<128x128xbf16>, vector<8x128xf32> -> vector<8x128xf32>
    %12 = vector.extract_strided_slice %11 {offsets = [0, 0], sizes = [8, 1], strides = [1, 1]} : vector<8x128xf32> to vector<8x1xf32>
    %c0_9 = arith.constant 0 : index
    %c0_10 = arith.constant 0 : index
    %13 = vector.load %arg5[%c0_9, %c0_10] : memref<1x1xf32, #tpu.memory_space<vmem>>, vector<1x1xf32>
    %14 = vector.broadcast %13 : vector<1x1xf32> to vector<8x1xf32>
    %15 = arith.addf %12, %14 : vector<8x1xf32>
    %c0_11 = arith.constant 0 : index
    %c0_12 = arith.constant 0 : index
    %16 = vector.load %arg6[%c0_11, %c0_12] : memref<8x1xf32, #tpu.memory_space<vmem>>, vector<8x1xf32>
    tpu.vector_store %arg6[%c0_11, %c0_12], %15 {strides = array<i32>} : memref<8x1xf32, #tpu.memory_space<vmem>>, vector<8x1xf32>,
    return
  }
  func.func @transform_0(%arg0: i32) -> (i32, i32) {
    %c0_i32 = arith.constant 0 : i32
    %c0_i32_0 = arith.constant 0 : i32
    return %arg0, %c0_i32 : i32, i32
  }
  func.func @transform_1(%arg0: i32) -> (i32, i32) {
    %c0_i32 = arith.constant 0 : i32
    %c0_i32_0 = arith.constant 0 : i32
    %c0_i32_1 = arith.constant 0 : i32
    return %c0_i32, %c0_i32_0 : i32, i32
  }
  func.func @transform_2(%arg0: i32) -> (i32, i32) {
    %c0_i32 = arith.constant 0 : i32
    %c0_i32_0 = arith.constant 0 : i32
    %c0_i32_1 = arith.constant 0 : i32
    return %c0_i32, %c0_i32_0 : i32, i32
  }
  func.func @transform_3(%arg0: i32) -> (i32, i32) {
    %c0_i32 = arith.constant 0 : i32
    %c0_i32_0 = arith.constant 0 : i32
    %c0_i32_1 = arith.constant 0 : i32
    return %c0_i32, %c0_i32_0 : i32, i32
  }
  func.func @transform_4(%arg0: i32) -> (i32, i32) {
    %c0_i32 = arith.constant 0 : i32
    %c0_i32_0 = arith.constant 0 : i32
    %c0_i32_1 = arith.constant 0 : i32
    return %c0_i32, %c0_i32_0 : i32, i32
  }
  func.func @transform_5(%arg0: i32) -> (i32, i32) {
    %c0_i32 = arith.constant 0 : i32
    %c0_i32_0 = arith.constant 0 : i32
    return %arg0, %c0_i32 : i32, i32
  }
}

</mosaic_0001>

<llo_original>
// kernel: tpu_custom_call.1
$region0: #{tpu_custom_call.1}
  #allocation0 [shape = 'u32[]', space=smem, size = 0x4, offset = 0x4, fixed_abs, tag = 'smem constant byte address 0x4 - core index']
  #allocation1 [shape = 'u32[144,128]{1,0:T(1,128)}', space=vmem, size = 0x12000, scoped, tag = 'internal scratch']
  #allocation2 [shape = 'f32[1,1]{1,0:T(1,128)S(1)}', space=vmem, size = 0x200, scoped, tag = 'scoped memory for tpu_custom_call.1']
  %s0 = inlined_call_operand.hbm [shape: f32[8,16], index: 0, kind: input, shape index: {}]
  %s1 = inlined_call_operand.hbm [shape: bf16[16,128], index: 1, kind: input, shape index: {}]
  %s2 = inlined_call_operand.vmem [shape: f32[1,128], index: 2, kind: input, shape index: {}]
  %s3 = inlined_call_operand.hbm [shape: bf16[128,128], index: 3, kind: input, shape index: {}]
  %s4 = inlined_call_operand.<no memory space> [shape: f32[1,1], index: 4, kind: input, shape index: {}]
  %s5 = inlined_call_operand.vmem [shape: f32[8,1], index: 5, kind: output, shape index: {}]
  %s6 = sld [smem:[#allocation0]]
  $region42: #{tpu_custom_call.1} parent=0
    _
  %s8 = ssub.s32 1, %s6
  %s9 = scalar_select 0, %s8, %s6
  %v10 = vstv %s4
  %11 = vst [vmem:[#allocation2] sm:$0x1] %v10
  $region1: #{tpu_custom_call.1} parent=0
    #allocation3 [shape = 'u8[4096]{0}', space=vmem, size = 0x1000, scoped, tag = 'input window, operand 0, single buffered']
    #allocation4 [shape = 's32[1]{0}', space=sflag, size = 0x4, scoped, tag = 'scoped memory for tpu_custom_call.1']
    #allocation5 [shape = 'u8[4096]{0}', space=vmem, size = 0x1000, scoped, tag = 'input window, operand 1, single buffered']
    #allocation6 [shape = 's32[1]{0}', space=sflag, size = 0x4, scoped, tag = 'scoped memory for tpu_custom_call.1']
    #allocation7 [shape = 'u8[32768]{0}', space=vmem, size = 0x8000, scoped, tag = 'input window, operand 3, single buffered']
    %12 = vsyncpa [#allocation4], 0
    %13 = vsyncpa [#allocation6], 0
    // Predicated region
    $region2: #{tpu_custom_call.1} parent=1 // pred_check
      _
    $region3: #{tpu_custom_call.1} parent=1 // pred_check_branch
      %15 = sbr.rel (0) target = $region5
    $region4: #{tpu_custom_call.1} parent=1 // pred_region
      %s17 = ssub.s32 128, 128
      %18 = vsyncadd [#allocation4], %s17
      %s20 = sshll.u32 [#allocation3], 4
      %s21 = int_to_ptr.vmem [resolvable:$true] %s20
      %23 = dma.hbm_to_vmem [thread:$0]  %s0, 128, %s21, [#allocation4]
    $region5: #{tpu_custom_call.1} parent=1 // pred_fallthru
      _
    // Predicated region
    $region6: #{tpu_custom_call.1} parent=1 // pred_check
      _
    $region7: #{tpu_custom_call.1} parent=1 // pred_check_branch
      %25 = sbr.rel (0) target = $region9
    $region8: #{tpu_custom_call.1} parent=1 // pred_region
      %s27 = ssub.s32 128, 128
      %28 = vsyncadd [#allocation6], %s27
      %s29 = sshll.u32 [#allocation5], 4
      %s30 = int_to_ptr.vmem [resolvable:$true] %s29
      %35 = dma.hbm_to_vmem [thread:$0]  %s1, 128, %s30, [#allocation6], 64, 64, 4
    $region9: #{tpu_custom_call.1} parent=1 // pred_fallthru
      _
    // Predicated region
    $region10: #{tpu_custom_call.1} parent=1 // pred_check
      _
    $region11: #{tpu_custom_call.1} parent=1 // pred_check_branch
      %37 = sbr.rel (0) target = $region13
    $region12: #{tpu_custom_call.1} parent=1 // pred_region
      _
    $region13: #{tpu_custom_call.1} parent=1 // pred_fallthru
      _
    // Predicated region
    $region14: #{tpu_custom_call.1} parent=1 // pred_check
      _
    $region15: #{tpu_custom_call.1} parent=1 // pred_check_branch
      %39 = sbr.rel (0) target = $region17
    $region16: #{tpu_custom_call.1} parent=1 // pred_region
      %s41 = ssub.s32 1024, 1024
      %42 = vsyncadd [#allocation6], %s41
      %s43 = sshll.u32 [#allocation7], 4
      %s44 = int_to_ptr.vmem [resolvable:$true] %s43
      %49 = dma.hbm_to_vmem [thread:$0]  %s3, 1024, %s44, [#allocation6], 64, 64, 4
    $region17: #{tpu_custom_call.1} parent=1 // pred_fallthru
      _
    // Predicated region
    $region18: #{tpu_custom_call.1} parent=1 // pred_check
      _
    $region19: #{tpu_custom_call.1} parent=1 // pred_check_branch
      %51 = sbr.rel (0) target = $region21
    $region20: #{tpu_custom_call.1} parent=1 // pred_region
      _
    $region21: #{tpu_custom_call.1} parent=1 // pred_fallthru
      _
    // Predicated region
    $region22: #{tpu_custom_call.1} parent=1 // pred_check
      _
    $region23: #{tpu_custom_call.1} parent=1 // pred_check_branch
      %53 = sbr.rel (0) target = $region25
    $region24: #{tpu_custom_call.1} parent=1 // pred_region
      %54 = dma.done [#allocation4], 128
    $region25: #{tpu_custom_call.1} parent=1 // pred_fallthru
      _
    // Predicated region
    $region26: #{tpu_custom_call.1} parent=1 // pred_check
      _
    $region27: #{tpu_custom_call.1} parent=1 // pred_check_branch
      %56 = sbr.rel (0) target = $region29
    $region28: #{tpu_custom_call.1} parent=1 // pred_region
      %57 = dma.done [#allocation6], 128
    $region29: #{tpu_custom_call.1} parent=1 // pred_fallthru
      _
    // Predicated region
    $region30: #{tpu_custom_call.1} parent=1 // pred_check
      _
    $region31: #{tpu_custom_call.1} parent=1 // pred_check_branch
      %59 = sbr.rel (0) target = $region33
    $region32: #{tpu_custom_call.1} parent=1 // pred_region
      %60 = dma.done [#allocation6], 1024
    $region33: #{tpu_custom_call.1} parent=1 // pred_fallthru
      _
    %v62 = vld [vmem:[#allocation3] sm:$0xff]
    %v63 = vpack.c.bf16 %v62, %v62
    %v64 = vld [vmem:[#allocation5] sm:$0xf]
    %v65 = vld [vmem:[#allocation5 + $0x4] sm:$0xf]
    %v66 = vld [vmem:[%s2] sm:$0x1]
    %v68 = vlaneseq
    %v69 = vshrl.u32 %v68, 7
    %v70 = vsub.s32 0, %v69
    %v71 = vrot.slane %v66, %v70
    %v75 = vunpack.c.l.b16 %v64
    %v76 = vunpack.c.l.b16 %v65
    %v77 = vpack.c.b16 %v76, %v75
    %vm79 = vcmask 130048
    %v81 = vsel %vm79, %v63, 0
    %83 = vmatprep.subr.bf16.mxu0 0
    %84 = vmatpush1.bf16.msra.mxu0 %v77
    %85 = vmatprep.subr.bf16.mxu0 0
    %86 = vmatpush1.bf16.msra.mxu0 0
    %87 = vmatprep.subr.bf16.mxu0 0
    %88 = vmatpush1.bf16.msra.mxu0 0
    %89 = vmatprep.subr.bf16.mxu0 0
    %90 = vmatpush1.bf16.msra.mxu0 0
    %91 = vmatprep.subr.bf16.mxu0 0
    %92 = vmatpush1.bf16.msra.mxu0 0
    %93 = vmatprep.subr.bf16.mxu0 0
    %94 = vmatpush1.bf16.msra.mxu0 0
    %95 = vmatprep.subr.bf16.mxu0 0
    %96 = vmatpush1.bf16.msra.mxu0 0
    %97 = vmatprep.subr.bf16.mxu0 0
    %98 = vmatpush1.bf16.msra.mxu0 0
    %99 = vmatprep.subr.bf16.mxu0 0
    %100 = vmatpush1.bf16.msra.mxu0 0
    %101 = vmatprep.subr.bf16.mxu0 0
    %102 = vmatpush1.bf16.msra.mxu0 0
    %103 = vmatprep.subr.bf16.mxu0 0
    %104 = vmatpush1.bf16.msra.mxu0 0
    %105 = vmatprep.subr.bf16.mxu0 0
    %106 = vmatpush1.bf16.msra.mxu0 0
    %107 = vmatprep.subr.bf16.mxu0 0
    %108 = vmatpush1.bf16.msra.mxu0 0
    %109 = vmatprep.subr.bf16.mxu0 0
    %110 = vmatpush1.bf16.msra.mxu0 0
    %111 = vmatprep.subr.bf16.mxu0 0
    %112 = vmatpush1.bf16.msra.mxu0 0
    %113 = vmatprep.subr.bf16.mxu0 0
    %114 = vmatpush1.bf16.msra.mxu0 0
    %115 = vmatprep.mubr.bf16.mxu0 0
    %116 = vmatmul.mubr.bf16.gmra.mrb[0].mxu0 %v81
    %v117 = vpop.f32.mrb[0].mxu0
    %v118 = vadd.f32 %v71, %v117
    %v119 = vpop.f32.mrb[0].mxu0
    %v120 = vpop.f32.mrb[0].mxu0
    %v121 = vpop.f32.mrb[0].mxu0
    %122 = vdwg.mxu0
    %v123 = vmax.f32 %v118, 0.0
    %v124 = vpack.c.bf16 %v123, %v123
    %v125 = vld [vmem:[#allocation7] sm:$0xf]
    %v126 = vld [vmem:[#allocation7 + $0x4] sm:$0xf]
    %v127 = vld [vmem:[#allocation7 + $0x8] sm:$0xf]
    %v128 = vld [vmem:[#allocation7 + $0xc] sm:$0xf]
    %v129 = vld [vmem:[#allocation7 + $0x10] sm:$0xf]
    %v130 = vld [vmem:[#allocation7 + $0x14] sm:$0xf]
    %v131 = vld [vmem:[#allocation7 + $0x18] sm:$0xf]
    %v132 = vld [vmem:[#allocation7 + $0x1c] sm:$0xf]
    %v133 = vld [vmem:[#allocation7 + $0x20] sm:$0xf]
    %v134 = vld [vmem:[#allocation7 + $0x24] sm:$0xf]
    %v135 = vld [vmem:[#allocation7 + $0x28] sm:$0xf]
    %v136 = vld [vmem:[#allocation7 + $0x2c] sm:$0xf]
    %v137 = vld [vmem:[#allocation7 + $0x30] sm:$0xf]
    %v138 = vld [vmem:[#allocation7 + $0x34] sm:$0xf]
    %v139 = vld [vmem:[#allocation7 + $0x38] sm:$0xf]
    %v140 = vld [vmem:[#allocation7 + $0x3c] sm:$0xf]
    %v157 = vunpack.c.l.b16 %v125
    %v158 = vunpack.c.l.b16 %v126
    %v159 = vunpack.c.l.b16 %v127
    %v160 = vunpack.c.l.b16 %v128
    %v161 = vunpack.c.l.b16 %v129
    %v162 = vunpack.c.l.b16 %v130
    %v163 = vunpack.c.l.b16 %v131
    %v164 = vunpack.c.l.b16 %v132
    %v165 = vunpack.c.l.b16 %v133
    %v166 = vunpack.c.l.b16 %v134
    %v167 = vunpack.c.l.b16 %v135
    %v168 = vunpack.c.l.b16 %v136
    %v169 = vunpack.c.l.b16 %v137
    %v170 = vunpack.c.l.b16 %v138
    %v171 = vunpack.c.l.b16 %v139
    %v172 = vunpack.c.l.b16 %v140
    %v173 = vpack.c.b16 %v158, %v157
    %v174 = vpack.c.b16 %v160, %v159
    %v175 = vpack.c.b16 %v162, %v161
    %v176 = vpack.c.b16 %v164, %v163
    %v177 = vpack.c.b16 %v166, %v165
    %v178 = vpack.c.b16 %v168, %v167
    %v179 = vpack.c.b16 %v170, %v169
    %v180 = vpack.c.b16 %v172, %v171
    %189 = vmatprep.subr.bf16.mxu0 0
    %190 = vmatpush1.bf16.msra.mxu0 %v173
    %191 = vmatprep.subr.bf16.mxu0 0
    %192 = vmatpush1.bf16.msra.mxu0 %v174
    %193 = vmatprep.subr.bf16.mxu0 0
    %194 = vmatpush1.bf16.msra.mxu0 %v175
    %195 = vmatprep.subr.bf16.mxu0 0
    %196 = vmatpush1.bf16.msra.mxu0 %v176
    %197 = vmatprep.subr.bf16.mxu0 0
    %198 = vmatpush1.bf16.msra.mxu0 %v177
    %199 = vmatprep.subr.bf16.mxu0 0
    %200 = vmatpush1.bf16.msra.mxu0 %v178
    %201 = vmatprep.subr.bf16.mxu0 0
    %202 = vmatpush1.bf16.msra.mxu0 %v179
    %203 = vmatprep.subr.bf16.mxu0 0
    %204 = vmatpush1.bf16.msra.mxu0 %v180
    %205 = vmatprep.subr.bf16.mxu0 0
    %206 = vmatpush1.bf16.msra.mxu0 0
    %207 = vmatprep.subr.bf16.mxu0 0
    %208 = vmatpush1.bf16.msra.mxu0 0
    %209 = vmatprep.subr.bf16.mxu0 0
    %210 = vmatpush1.bf16.msra.mxu0 0
    %211 = vmatprep.subr.bf16.mxu0 0
    %212 = vmatpush1.bf16.msra.mxu0 0
    %213 = vmatprep.subr.bf16.mxu0 0
    %214 = vmatpush1.bf16.msra.mxu0 0
    %215 = vmatprep.subr.bf16.mxu0 0
    %216 = vmatpush1.bf16.msra.mxu0 0
    %217 = vmatprep.subr.bf16.mxu0 0
    %218 = vmatpush1.bf16.msra.mxu0 0
    %219 = vmatprep.subr.bf16.mxu0 0
    %220 = vmatpush1.bf16.msra.mxu0 0
    %221 = vmatprep.mubr.bf16.mxu0 0
    %222 = vmatmul.mubr.bf16.gmra.mrb[0].mxu0 %v124
    %v223 = vpop.f32.mrb[0].mxu0
    %v224 = vadd.f32 0.0, %v223
    %v225 = vpop.f32.mrb[0].mxu0
    %v226 = vpop.f32.mrb[0].mxu0
    %v227 = vpop.f32.mrb[0].mxu0
    %228 = vdwg.mxu0
    %v229 = vld [vmem:[#allocation2] sm:$0x1]
    %v231 = vlaneseq
    %v232 = vshrl.u32 %v231, 7
    %v233 = vsub.s32 0, %v232
    %v234 = vrot.slane %v229, %v233
    %v236 = vadd.f32 %v224, %v234
    %vm237 = vcmask 7168
    %238 = vst.msk [vmem:[%s5] sm:$0xff] %vm237, %v236
    // Predicated region
    $region34: #{tpu_custom_call.1} parent=1 // pred_check
      _
    $region35: #{tpu_custom_call.1} parent=1 // pred_check_branch
      %240 = sbr.rel (0) target = $region37
    $region36: #{tpu_custom_call.1} parent=1 // pred_region
      _
    $region37: #{tpu_custom_call.1} parent=1 // pred_fallthru
      _
    // Predicated region
    $region38: #{tpu_custom_call.1} parent=1 // pred_check
      _
    $region39: #{tpu_custom_call.1} parent=1 // pred_check_branch
      %242 = sbr.rel (0) target = $region41
    $region40: #{tpu_custom_call.1} parent=1 // pred_region
      _
    $region41: #{tpu_custom_call.1} parent=1 // pred_fallthru
      _
    %243 = vsyncpa [#allocation4], 1
    %244 = vsyncpa [#allocation6], 1

</llo_original>
